<compile_context>
chip_gen: v6e
topology: v6e:2x2x1
jax: 0.10.0
libtpu: 0.0.40
codegen_flags: <defaults>
</compile_context>

<pallas_src>
import functools

import jax
import jax.numpy as jnp
from jax.experimental import pallas as pl
from jax.experimental.pallas import tpu as pltpu

HIDDEN = 128  # fixed by the torch module


def _round_up(x, m):
    return ((x + m - 1) // m) * m


def actor_kernel(x_ref, w1_ref, w23_ref, w4_ref, b123_ref, b4_ref, o_ref):
    # x tile: (TB, n_states) f32 -> cast to bf16 for the MXU, accumulate in f32.
    x = x_ref[...].astype(jnp.bfloat16)
    h = jnp.dot(x, w1_ref[...], preferred_element_type=jnp.float32) + b123_ref[0, :]
    h = jnp.dot(h.astype(jnp.bfloat16), w23_ref[0], preferred_element_type=jnp.float32) + b123_ref[1, :]
    h = jnp.dot(h.astype(jnp.bfloat16), w23_ref[1], preferred_element_type=jnp.float32) + b123_ref[2, :]
    a = jnp.dot(h.astype(jnp.bfloat16), w4_ref[...], preferred_element_type=jnp.float32) + b4_ref[...]
    o_ref[...] = a.astype(o_ref.dtype)  # (TB, N_pad) lane-dense store


def actor_forward(state, params, *, block_b=512):
    """state: (B, n_states) f32.  Returns (B, n_actions) f32 actions.

    params: weights stored transposed as (in, out) f32 masters; cast to bf16
    here. Biases stay f32.
    """
    B, n_states = state.shape
    H = HIDDEN
    n_actions = params["w4"].shape[1]
    assert params["w1"].shape == (n_states, H)
    assert n_actions <= 128, "kernel assumes a small action head (<=128)"

    # Batch tile: multiple of 8 sublanes, clamped for tiny batches.
    TB = _round_up(min(block_b, _round_up(B, 8)), 8)
    B_pad = _round_up(B, TB)
    N_pad = 128  # lane-dense output (n_actions <= 128)

    # Pad batch with zero rows (sliced off at the end).
    x_pad = jnp.zeros((B_pad, n_states), jnp.float32).at[:B, :].set(state)

    # bf16 weights, fused/stacked to cut DMA descriptors; f32 biases.
    w1 = params["w1"].astype(jnp.bfloat16)                                   # (n_states, H)
    w23 = jnp.stack([params["w2"], params["w3"]]).astype(jnp.bfloat16)       # (2, H, H)
    w4 = jnp.zeros((H, N_pad), jnp.float32).at[:, :n_actions].set(params["w4"]).astype(jnp.bfloat16)
    b123 = jnp.stack([params["b1"], params["b2"], params["b3"]])             # (3, H) f32
    b4 = jnp.zeros((1, N_pad), jnp.float32).at[0, :n_actions].set(params["b4"])

    grid = (B_pad // TB,)
    grid_spec = pltpu.PrefetchScalarGridSpec(
        num_scalar_prefetch=0,
        grid=grid,
        in_specs=[
            pl.BlockSpec((TB, n_states), lambda i: (i, 0)),      # x: streamed per step
            pl.BlockSpec((n_states, H), lambda i: (0, 0)),       # w1: resident
            pl.BlockSpec((2, H, H), lambda i: (0, 0, 0)),        # w2,w3: resident
            pl.BlockSpec((H, N_pad), lambda i: (0, 0)),          # w4 (padded): resident
            pl.BlockSpec((3, H), lambda i: (0, 0)),              # b1..b3: resident
            pl.BlockSpec((1, N_pad), lambda i: (0, 0)),          # b4 (padded): resident
        ],
        out_specs=pl.BlockSpec((TB, N_pad), lambda i: (i, 0)),
    )

    out = pl.pallas_call(
        actor_kernel,
        out_shape=jax.ShapeDtypeStruct((B_pad, N_pad), jnp.float32),
        grid_spec=grid_spec,
        compiler_params=pltpu.CompilerParams(
            dimension_semantics=("parallel",),
        ),
    )(x_pad, w1, w23, w4, b123, b4)

    return out[:B, :n_actions]


def init_params(key, n_states, n_actions, hidden=HIDDEN):
    """PyTorch-default-style uniform init. Weights stored as (in, out) = W.T, f32."""
    ks = jax.random.split(key, 8)

    def lin(kw, kb, fan_in, fan_out):
        bound = 1.0 / jnp.sqrt(fan_in)
        w = jax.random.uniform(kw, (fan_in, fan_out), jnp.float32, -bound, bound)
        b = jax.random.uniform(kb, (fan_out,), jnp.float32, -bound, bound)
        return w, b

    w1, b1 = lin(ks[0], ks[1], n_states, hidden)
    w2, b2 = lin(ks[2], ks[3], hidden, hidden)
    w3, b3 = lin(ks[4], ks[5], hidden, hidden)
    w4, b4 = lin(ks[6], ks[7], hidden, n_actions)
    return dict(w1=w1, b1=b1, w2=w2, b2=b2, w3=w3, b3=b3, w4=w4, b4=b4)


def actor_reference(state, p):
    # Full f32 reference (kernel uses bf16 weights -> loosened tolerance below).
    h = state @ p["w1"] + p["b1"]
    h = h @ p["w2"] + p["b2"]
    h = h @ p["w3"] + p["b3"]
    return h @ p["w4"] + p["b4"]


if __name__ == "__main__":
    key = jax.random.PRNGKey(0)
    k_param, k_state = jax.random.split(key)

    # Small but non-trivial shapes: batch not a multiple of the tile (exercises
    # padding + a 2-step parallel grid with block_b=128), typical RL actor dims.
    B, n_states, n_actions = 200, 32, 4
    params = init_params(k_param, n_states, n_actions)
    state = jax.random.normal(k_state, (B, n_states), jnp.float32)

    action = actor_forward(state, params, block_b=128)
    action = jax.block_until_ready(action)

    ref = actor_reference(state, params)
    assert action.shape == (B, n_actions)
    # bf16 weights with f32 accumulation vs f32 reference -> relaxed tolerance.
    assert jnp.allclose(action, ref, atol=3e-2, rtol=3e-2)

    print("KERNEL_OK")
</pallas_src>

<mosaic_0001>
module attributes {stable_mosaic.version = 11 : i64} {
  func.func @actor_kernel(%arg0: i32, %arg1: memref<128x32xf32, #tpu.memory_space<vmem>>, %arg2: memref<32x128xbf16, #tpu.memory_space<vmem>>, %arg3: memref<2x128x128xbf16, #tpu.memory_space<vmem>>, %arg4: memref<128x128xbf16, #tpu.memory_space<vmem>>, %arg5: memref<3x128xf32, #tpu.memory_space<vmem>>, %arg6: memref<1x128xf32, #tpu.memory_space<vmem>>, %arg7: memref<128x128xf32, #tpu.memory_space<vmem>>) attributes {dimension_semantics = [#tpu.dimension_semantics<parallel>], iteration_bounds = array<i64: 2>, scalar_prefetch = 0 : i64, scratch_operands = 0 : i64, tpu.core_type = #tpu.core_type<tc>, window_params = [{transform_indices = @transform_0, window_bounds = array<i64: 128, 32>}, {pipeline_mode = #tpu.pipeline_mode<synchronous>, transform_indices = @transform_1, window_bounds = array<i64: 32, 128>}, {pipeline_mode = #tpu.pipeline_mode<synchronous>, transform_indices = @transform_2, window_bounds = array<i64: 2, 128, 128>}, {pipeline_mode = #tpu.pipeline_mode<synchronous>, transform_indices = @transform_3, window_bounds = array<i64: 128, 128>}, {pipeline_mode = #tpu.pipeline_mode<synchronous>, transform_indices = @transform_4, window_bounds = array<i64: 3, 128>}, {pipeline_mode = #tpu.pipeline_mode<synchronous>, transform_indices = @transform_5, window_bounds = array<i64: 1, 128>}, {transform_indices = @transform_6, window_bounds = array<i64: 128, 128>}]} {
    %c0 = arith.constant 0 : index
    %c0_0 = arith.constant 0 : index
    %0 = vector.load %arg1[%c0, %c0_0] : memref<128x32xf32, #tpu.memory_space<vmem>>, vector<128x32xf32>
    %1 = arith.truncf %0 : vector<128x32xf32> to vector<128x32xbf16>
    %c0_1 = arith.constant 0 : index
    %c0_2 = arith.constant 0 : index
    %2 = vector.load %arg2[%c0_1, %c0_2] : memref<32x128xbf16, #tpu.memory_space<vmem>>, vector<32x128xbf16>
    %cst = arith.constant dense<0.000000e+00> : vector<128x128xf32>
    %3 = tpu.matmul %1, %2, %cst {dimension_numbers = #tpu.dot_dimension_numbers<[1], [0], [0], [1], [0, 0, 1, 1], [], []>} : vector<128x32xbf16>, vector<32x128xbf16>, vector<128x128xf32> -> vector<128x128xf32>
    %c0_3 = arith.constant 0 : index
    %c0_4 = arith.constant 0 : index
    %4 = vector.load %arg5[%c0_3, %c0_4] : memref<3x128xf32, #tpu.memory_space<vmem>>, vector<1x128xf32>
    %5 = vector.shape_cast %4 : vector<1x128xf32> to vector<128xf32>
    %6 = vector.shape_cast %5 : vector<128xf32> to vector<1x128xf32>
    %7 = vector.broadcast %6 : vector<1x128xf32> to vector<128x128xf32>
    %8 = arith.addf %3, %7 : vector<128x128xf32>
    %9 = arith.truncf %8 : vector<128x128xf32> to vector<128x128xbf16>
    %c0_5 = arith.constant 0 : index
    %c0_6 = arith.constant 0 : index
    %c0_7 = arith.constant 0 : index
    %10 = vector.load %arg3[%c0_5, %c0_6, %c0_7] : memref<2x128x128xbf16, #tpu.memory_space<vmem>>, vector<1x128x128xbf16>
    %11 = vector.shape_cast %10 : vector<1x128x128xbf16> to vector<128x128xbf16>
    %cst_8 = arith.constant dense<0.000000e+00> : vector<128x128xf32>
    %12 = tpu.matmul %9, %11, %cst_8 {dimension_numbers = #tpu.dot_dimension_numbers<[1], [0], [0], [1], [0, 0, 1, 1], [], []>} : vector<128x128xbf16>, vector<128x128xbf16>, vector<128x128xf32> -> vector<128x128xf32>
    %c1 = arith.constant 1 : index
    %c0_9 = arith.constant 0 : index
    %13 = vector.load %arg5[%c1, %c0_9] : memref<3x128xf32, #tpu.memory_space<vmem>>, vector<1x128xf32>
    %14 = vector.shape_cast %13 : vector<1x128xf32> to vector<128xf32>
    %15 = vector.shape_cast %14 : vector<128xf32> to vector<1x128xf32>
    %16 = vector.broadcast %15 : vector<1x128xf32> to vector<128x128xf32>
    %17 = arith.addf %12, %16 : vector<128x128xf32>
    %18 = arith.truncf %17 : vector<128x128xf32> to vector<128x128xbf16>
    %c1_10 = arith.constant 1 : index
    %c0_11 = arith.constant 0 : index
    %c0_12 = arith.constant 0 : index
    %19 = vector.load %arg3[%c1_10, %c0_11, %c0_12] : memref<2x128x128xbf16, #tpu.memory_space<vmem>>, vector<1x128x128xbf16>
    %20 = vector.shape_cast %19 : vector<1x128x128xbf16> to vector<128x128xbf16>
    %cst_13 = arith.constant dense<0.000000e+00> : vector<128x128xf32>
    %21 = tpu.matmul %18, %20, %cst_13 {dimension_numbers = #tpu.dot_dimension_numbers<[1], [0], [0], [1], [0, 0, 1, 1], [], []>} : vector<128x128xbf16>, vector<128x128xbf16>, vector<128x128xf32> -> vector<128x128xf32>
    %c2 = arith.constant 2 : index
    %c0_14 = arith.constant 0 : index
    %22 = vector.load %arg5[%c2, %c0_14] : memref<3x128xf32, #tpu.memory_space<vmem>>, vector<1x128xf32>
    %23 = vector.shape_cast %22 : vector<1x128xf32> to vector<128xf32>
    %24 = vector.shape_cast %23 : vector<128xf32> to vector<1x128xf32>
    %25 = vector.broadcast %24 : vector<1x128xf32> to vector<128x128xf32>
    %26 = arith.addf %21, %25 : vector<128x128xf32>
    %27 = arith.truncf %26 : vector<128x128xf32> to vector<128x128xbf16>
    %c0_15 = arith.constant 0 : index
    %c0_16 = arith.constant 0 : index
    %28 = vector.load %arg4[%c0_15, %c0_16] : memref<128x128xbf16, #tpu.memory_space<vmem>>, vector<128x128xbf16>
    %cst_17 = arith.constant dense<0.000000e+00> : vector<128x128xf32>
    %29 = tpu.matmul %27, %28, %cst_17 {dimension_numbers = #tpu.dot_dimension_numbers<[1], [0], [0], [1], [0, 0, 1, 1], [], []>} : vector<128x128xbf16>, vector<128x128xbf16>, vector<128x128xf32> -> vector<128x128xf32>
    %c0_18 = arith.constant 0 : index
    %c0_19 = arith.constant 0 : index
    %30 = vector.load %arg6[%c0_18, %c0_19] : memref<1x128xf32, #tpu.memory_space<vmem>>, vector<1x128xf32>
    %31 = vector.broadcast %30 : vector<1x128xf32> to vector<128x128xf32>
    %32 = arith.addf %29, %31 : vector<128x128xf32>
    %c0_20 = arith.constant 0 : index
    %c0_21 = arith.constant 0 : index
    %33 = vector.load %arg7[%c0_20, %c0_21] : memref<128x128xf32, #tpu.memory_space<vmem>>, vector<128x128xf32>
    tpu.vector_store %arg7[%c0_20, %c0_21], %32 {strides = array<i32>} : memref<128x128xf32, #tpu.memory_space<vmem>>, vector<128x128xf32>,
    return
  }
  func.func @transform_0(%arg0: i32) -> (i32, i32) {
    %c0_i32 = arith.constant 0 : i32
    %c0_i32_0 = arith.constant 0 : i32
    return %arg0, %c0_i32 : i32, i32
  }
  func.func @transform_1(%arg0: i32) -> (i32, i32) {
    %c0_i32 = arith.constant 0 : i32
    %c0_i32_0 = arith.constant 0 : i32
    %c0_i32_1 = arith.constant 0 : i32
    return %c0_i32, %c0_i32_0 : i32, i32
  }
  func.func @transform_2(%arg0: i32) -> (i32, i32, i32) {
    %c0_i32 = arith.constant 0 : i32
    %c0_i32_0 = arith.constant 0 : i32
    %c0_i32_1 = arith.constant 0 : i32
    %c0_i32_2 = arith.constant 0 : i32
    return %c0_i32, %c0_i32_0, %c0_i32_1 : i32, i32, i32
  }
  func.func @transform_3(%arg0: i32) -> (i32, i32) {
    %c0_i32 = arith.constant 0 : i32
    %c0_i32_0 = arith.constant 0 : i32
    %c0_i32_1 = arith.constant 0 : i32
    return %c0_i32, %c0_i32_0 : i32, i32
  }
  func.func @transform_4(%arg0: i32) -> (i32, i32) {
    %c0_i32 = arith.constant 0 : i32
    %c0_i32_0 = arith.constant 0 : i32
    %c0_i32_1 = arith.constant 0 : i32
    return %c0_i32, %c0_i32_0 : i32, i32
  }
  func.func @transform_5(%arg0: i32) -> (i32, i32) {
    %c0_i32 = arith.constant 0 : i32
    %c0_i32_0 = arith.constant 0 : i32
    %c0_i32_1 = arith.constant 0 : i32
    return %c0_i32, %c0_i32_0 : i32, i32
  }
  func.func @transform_6(%arg0: i32) -> (i32, i32) {
    %c0_i32 = arith.constant 0 : i32
    %c0_i32_0 = arith.constant 0 : i32
    return %arg0, %c0_i32 : i32, i32
  }
}

</mosaic_0001>

<llo_original>
// kernel: tpu_custom_call.1
$region0: #{tpu_custom_call.1}
  #allocation0 [shape = 'u32[]', space=smem, size = 0x4, offset = 0x4, fixed_abs, tag = 'smem constant byte address 0x4 - core index']
  #allocation1 [shape = 'u32[144,128]{1,0:T(1,128)}', space=vmem, size = 0x12000, scoped, tag = 'internal scratch']
  %s0 = inlined_call_operand.vmem [shape: f32[256,32], index: 0, kind: input, shape index: {}]
  %s1 = inlined_call_operand.vmem [shape: bf16[32,128], index: 1, kind: input, shape index: {}]
  %s2 = inlined_call_operand.vmem [shape: bf16[2,128,128], index: 2, kind: input, shape index: {}]
  %s3 = inlined_call_operand.vmem [shape: bf16[128,128], index: 3, kind: input, shape index: {}]
  %s4 = inlined_call_operand.vmem [shape: f32[3,128], index: 4, kind: input, shape index: {}]
  %s5 = inlined_call_operand.vmem [shape: f32[1,128], index: 5, kind: input, shape index: {}]
  %s6 = inlined_call_operand.hbm [shape: f32[256,128], index: 6, kind: output, shape index: {}]
  %s7 = sld [smem:[#allocation0]]
  $region57: #{tpu_custom_call.1} parent=0
    _
  %s9 = ssub.s32 1, %s7
  %s10 = scalar_select 0, %s9, %s7
  $region1: #{tpu_custom_call.1} parent=0
    #allocation2 [shape = 'u8[131072]{0}', space=vmem, size = 0x20000, scoped, tag = 'output window, operand 0']
    #allocation3 [shape = 's32[2]{0}', space=sflag, size = 0x8, scoped, tag = 'scoped memory for tpu_custom_call.1']
    %11 = vsyncpa [#allocation3], 0
    %s12 = scalar_lea.sflag [#allocation3], 1
    %13 = vsyncpa %s12, 0
    loop: start=0, step=1, limit=4
    $region2: #{tpu_custom_call.1} parent=1 // loop_pre_header
      _
    $region3: #{tpu_custom_call.1} parent=1 // loop_header
      %s15 = sphi 0, %s19
      %p16 = scmp.ge.s32.totalorder %s15, 4
      %s25 = sphi 0, %s27
      %s28 = sphi 0, %s25
      %s29 = sphi 0, %s28
      %s45 = sphi 0, %s29
      %s49 = sphi 0, %s49
      %s51 = sphi 0, %s49
      %s52 = sphi 0, %s51
      %s66 = sphi 0, %s52
      %s70 = sphi 0, %s70
      %s72 = sphi 0, %s70
      %s73 = sphi 0, %s72
      %s87 = sphi 0, %s73
      %s91 = sphi 0, %s91
      %s93 = sphi 0, %s91
      %s94 = sphi 0, %s93
      %s108 = sphi 0, %s94
      %s112 = sphi 0, %s112
      %s114 = sphi 0, %s112
      %s115 = sphi 0, %s114
      %s129 = sphi 0, %s115
      %s133 = sphi 0, %s133
      %s135 = sphi 0, %s133
      %s136 = sphi 0, %s135
      %s150 = sphi 0, %s136
      %s156 = sphi 0, %s158
      %s159 = sphi 0, %s156
      %s160 = sphi 0, %s159
      %s176 = sphi 0, %s160
    $region4: #{tpu_custom_call.1} parent=1 // loop_header_branch
      %18 = sbr.rel (%p16) target = $region8
    $region5: #{tpu_custom_call.1} parent=1 // loop_body
      %s20 = ssub.s32 %s15, 1
      %s21 = ssub.s32 %s15, 2
      %s22 = sadd.s32 %s15, 1
      %s23 = ssub.s32 %s15, %s22
      %p24 = scmp.eq.s32.totalorder %s23, 0
      %s26 = sadd.s32 %s25, 1
      %s27 = scalar_select %p24, %s25, %s26
      %p30 = pneg %p24
      %p31 = scmp.eq.s32.totalorder %s15, 1
      %p32 = por %p30, %p31
      %p33 = scmp.ne.s32.totalorder %s25, %s28
      %p34 = scmp.eq.s32.totalorder %s15, 0
      %p35 = por %p33, %p34
      %p36 = scmp.ne.s32.totalorder %s25, %s28
      %p37 = scmp.eq.s32.totalorder %s20, 1
      %p38 = por %p36, %p37
      %p39 = scmp.ne.s32.totalorder %s28, %s29
      %p40 = scmp.eq.s32.totalorder %s20, 0
      %p41 = por %p39, %p40
      %p42 = scmp.ne.s32.totalorder %s28, %s29
      %p43 = scmp.eq.s32.totalorder %s21, 1
      %p44 = por %p42, %p43
      %p46 = scmp.ne.s32.totalorder %s29, %s45
      %p47 = scmp.eq.s32.totalorder %s21, 0
      %p48 = por %p46, %p47
      %s50 = sadd.s32 %s49, 1
      %p53 = scmp.eq.s32.totalorder %s15, 1
      %p54 = scmp.ne.s32.totalorder %s49, %s51
      %p55 = scmp.eq.s32.totalorder %s15, 0
      %p56 = por %p54, %p55
      %p57 = scmp.ne.s32.totalorder %s49, %s51
      %p58 = scmp.eq.s32.totalorder %s20, 1
      %p59 = por %p57, %p58
      %p60 = scmp.ne.s32.totalorder %s51, %s52
      %p61 = scmp.eq.s32.totalorder %s20, 0
      %p62 = por %p60, %p61
      %p63 = scmp.ne.s32.totalorder %s51, %s52
      %p64 = scmp.eq.s32.totalorder %s21, 1
      %p65 = por %p63, %p64
      %p67 = scmp.ne.s32.totalorder %s52, %s66
      %p68 = scmp.eq.s32.totalorder %s21, 0
      %p69 = por %p67, %p68
      %s71 = sadd.s32 %s70, 1
      %p74 = scmp.eq.s32.totalorder %s15, 1
      %p75 = scmp.ne.s32.totalorder %s70, %s72
      %p76 = scmp.eq.s32.totalorder %s15, 0
      %p77 = por %p75, %p76
      %p78 = scmp.ne.s32.totalorder %s70, %s72
      %p79 = scmp.eq.s32.totalorder %s20, 1
      %p80 = por %p78, %p79
      %p81 = scmp.ne.s32.totalorder %s72, %s73
      %p82 = scmp.eq.s32.totalorder %s20, 0
      %p83 = por %p81, %p82
      %p84 = scmp.ne.s32.totalorder %s72, %s73
      %p85 = scmp.eq.s32.totalorder %s21, 1
      %p86 = por %p84, %p85
      %p88 = scmp.ne.s32.totalorder %s73, %s87
      %p89 = scmp.eq.s32.totalorder %s21, 0
      %p90 = por %p88, %p89
      %s92 = sadd.s32 %s91, 1
      %p95 = scmp.eq.s32.totalorder %s15, 1
      %p96 = scmp.ne.s32.totalorder %s91, %s93
      %p97 = scmp.eq.s32.totalorder %s15, 0
      %p98 = por %p96, %p97
      %p99 = scmp.ne.s32.totalorder %s91, %s93
      %p100 = scmp.eq.s32.totalorder %s20, 1
      %p101 = por %p99, %p100
      %p102 = scmp.ne.s32.totalorder %s93, %s94
      %p103 = scmp.eq.s32.totalorder %s20, 0
      %p104 = por %p102, %p103
      %p105 = scmp.ne.s32.totalorder %s93, %s94
      %p106 = scmp.eq.s32.totalorder %s21, 1
      %p107 = por %p105, %p106
      %p109 = scmp.ne.s32.totalorder %s94, %s108
      %p110 = scmp.eq.s32.totalorder %s21, 0
      %p111 = por %p109, %p110
      %s113 = sadd.s32 %s112, 1
      %p116 = scmp.eq.s32.totalorder %s15, 1
      %p117 = scmp.ne.s32.totalorder %s112, %s114
      %p118 = scmp.eq.s32.totalorder %s15, 0
      %p119 = por %p117, %p118
      %p120 = scmp.ne.s32.totalorder %s112, %s114
      %p121 = scmp.eq.s32.totalorder %s20, 1
      %p122 = por %p120, %p121
      %p123 = scmp.ne.s32.totalorder %s114, %s115
      %p124 = scmp.eq.s32.totalorder %s20, 0
      %p125 = por %p123, %p124
      %p126 = scmp.ne.s32.totalorder %s114, %s115
      %p127 = scmp.eq.s32.totalorder %s21, 1
      %p128 = por %p126, %p127
      %p130 = scmp.ne.s32.totalorder %s115, %s129
      %p131 = scmp.eq.s32.totalorder %s21, 0
      %p132 = por %p130, %p131
      %s134 = sadd.s32 %s133, 1
      %p137 = scmp.eq.s32.totalorder %s15, 1
      %p138 = scmp.ne.s32.totalorder %s133, %s135
      %p139 = scmp.eq.s32.totalorder %s15, 0
      %p140 = por %p138, %p139
      %p141 = scmp.ne.s32.totalorder %s133, %s135
      %p142 = scmp.eq.s32.totalorder %s20, 1
      %p143 = por %p141, %p142
      %p144 = scmp.ne.s32.totalorder %s135, %s136
      %p145 = scmp.eq.s32.totalorder %s20, 0
      %p146 = por %p144, %p145
      %p147 = scmp.ne.s32.totalorder %s135, %s136
      %p148 = scmp.eq.s32.totalorder %s21, 1
      %p149 = por %p147, %p148
      %p151 = scmp.ne.s32.totalorder %s136, %s150
      %p152 = scmp.eq.s32.totalorder %s21, 0
      %p153 = por %p151, %p152
      %s154 = ssub.s32 %s15, %s22
      %p155 = scmp.eq.s32.totalorder %s154, 0
      %s157 = sadd.s32 %s156, 1
      %s158 = scalar_select %p155, %s156, %s157
      %p161 = pneg %p155
      %p162 = scmp.eq.s32.totalorder %s15, 1
      %p163 = por %p161, %p162
      %p164 = scmp.ne.s32.totalorder %s156, %s159
      %p165 = scmp.eq.s32.totalorder %s15, 0
      %p166 = por %p164, %p165
      %p167 = scmp.ne.s32.totalorder %s156, %s159
      %p168 = scmp.eq.s32.totalorder %s20, 1
      %p169 = por %p167, %p168
      %p170 = scmp.ne.s32.totalorder %s159, %s160
      %p171 = scmp.eq.s32.totalorder %s20, 0
      %p172 = por %p170, %p171
      %p173 = scmp.ne.s32.totalorder %s159, %s160
      %p174 = scmp.eq.s32.totalorder %s21, 1
      %p175 = por %p173, %p174
      %p177 = scmp.ne.s32.totalorder %s160, %s176
      %p178 = scmp.eq.s32.totalorder %s21, 0
      %p179 = por %p177, %p178
      %p180 = scmp.le.s32.totalorder 1, %s15
      %p181 = scmp.lt.s32.totalorder %s15, 3
      %p182 = pnand %p180, %p181
      %p183 = pneg %p182
      // Predicated region
      $region9: #{tpu_custom_call.1} parent=5 // pred_check
        _
      $region10: #{tpu_custom_call.1} parent=5 // pred_check_branch
        %185 = sbr.rel (%p182) target = $region12
      $region11: #{tpu_custom_call.1} parent=5 // pred_region
        %s186 = ssub.s32 %s15, 1
        // Predicated region
        $region13: #{tpu_custom_call.1} parent=11 // pred_check
          %p187 = pneg %p62
        $region14: #{tpu_custom_call.1} parent=11 // pred_check_branch
          %189 = sbr.rel (%p187) target = $region16
        $region15: #{tpu_custom_call.1} parent=11 // pred_region
          _
        $region16: #{tpu_custom_call.1} parent=11 // pred_fallthru
          _
        // Predicated region
        $region17: #{tpu_custom_call.1} parent=11 // pred_check
          %p190 = pneg %p83
        $region18: #{tpu_custom_call.1} parent=11 // pred_check_branch
          %192 = sbr.rel (%p190) target = $region20
        $region19: #{tpu_custom_call.1} parent=11 // pred_region
          _
        $region20: #{tpu_custom_call.1} parent=11 // pred_fallthru
          _
        // Predicated region
        $region21: #{tpu_custom_call.1} parent=11 // pred_check
          %p193 = pneg %p104
        $region22: #{tpu_custom_call.1} parent=11 // pred_check_branch
          %195 = sbr.rel (%p193) target = $region24
        $region23: #{tpu_custom_call.1} parent=11 // pred_region
          _
        $region24: #{tpu_custom_call.1} parent=11 // pred_fallthru
          _
        // Predicated region
        $region25: #{tpu_custom_call.1} parent=11 // pred_check
          %p196 = pneg %p125
        $region26: #{tpu_custom_call.1} parent=11 // pred_check_branch
          %198 = sbr.rel (%p196) target = $region28
        $region27: #{tpu_custom_call.1} parent=11 // pred_region
          _
        $region28: #{tpu_custom_call.1} parent=11 // pred_fallthru
          _
        // Predicated region
        $region29: #{tpu_custom_call.1} parent=11 // pred_check
          %p199 = pneg %p146
        $region30: #{tpu_custom_call.1} parent=11 // pred_check_branch
          %201 = sbr.rel (%p199) target = $region32
        $region31: #{tpu_custom_call.1} parent=11 // pred_region
          _
        $region32: #{tpu_custom_call.1} parent=11 // pred_fallthru
          _
      $region12: #{tpu_custom_call.1} parent=5 // pred_fallthru
        _
      %p202 = scmp.lt.s32.totalorder %s15, 2
      // Predicated region
      $region33: #{tpu_custom_call.1} parent=5 // pred_check
        %p203 = pneg %p202
      $region34: #{tpu_custom_call.1} parent=5 // pred_check_branch
        %205 = sbr.rel (%p203) target = $region36
      $region35: #{tpu_custom_call.1} parent=5 // pred_region
        // Predicated region
        $region37: #{tpu_custom_call.1} parent=35 // pred_check
          %p206 = pneg %p35
        $region38: #{tpu_custom_call.1} parent=35 // pred_check_branch
          %208 = sbr.rel (%p206) target = $region40
        $region39: #{tpu_custom_call.1} parent=35 // pred_region
          %s209 = smul.u32 16, %s15
          %p210 = scmp.lt.s32.totalorder %s209, 31
          %s211 = scalar_select %p210, %s209, 31
          %s212 = smul.addr %s211, 8
          %s213 = scalar_lea.vmem %s0, %s212
          %s214 = smul.u32 16, %s15
        $region40: #{tpu_custom_call.1} parent=35 // pred_fallthru
          _
      $region36: #{tpu_custom_call.1} parent=5 // pred_fallthru
        _
      %p215 = scmp.le.s32.totalorder 1, %s15
      %p216 = scmp.lt.s32.totalorder %s15, 3
      %p217 = pnand %p215, %p216
      %p218 = pneg %p217
      // Predicated region
      $region41: #{tpu_custom_call.1} parent=5 // pred_check
        _
      $region42: #{tpu_custom_call.1} parent=5 // pred_check_branch
        %220 = sbr.rel (%p217) target = $region44
      $region43: #{tpu_custom_call.1} parent=5 // pred_region
        %s221 = ssub.s32 %s15, 1
        %s222 = smul.u32 16, %s20
        %p223 = scmp.lt.s32.totalorder %s222, 31
        %s224 = scalar_select %p223, %s222, 31
        %s225 = smul.addr %s224, 8
        %s226 = scalar_lea.vmem %s0, %s225
        %p227 = pneg %p41
        %p228 = pneg %p38
        %p229 = pneg %p62
        %p230 = pneg %p59
        %p231 = pneg %p83
        %p232 = pneg %p80
        %p233 = pneg %p104
        %p234 = pneg %p101
        %p235 = pneg %p125
        %p236 = pneg %p122
        %p237 = pneg %p146
        %p238 = pneg %p143
        %p239 = pneg %p172
        %p240 = pneg %p169
        %s241 = sand.u32 %s159, 1
        %s242 = scalar_lea.sflag [#allocation3], %s241
        %s243 = sand.u32 %s159, 1
        %s244 = smul.addr %s243, 128
        %s245 = scalar_lea.vmem [#allocation2], %s244
        %s246 = smul.u32 16, %s20
        %p247 = scmp.lt.s32.totalorder %s246, 31
        %s248 = scalar_select %p247, %s246, 31
        %s249 = smul.addr %s248, 8
        %s250 = scalar_lea.vmem %s0, %s249
        %s251 = smul.u32 16, %s20
        %s252 = smul.u32 16, %s20
        %v254 = vld [vmem:[%s250] sm:$0xff]
        %v255 = vld [vmem:[%s250 + $0x8] sm:$0xff]
        %v256 = vld [vmem:[%s250 + $0x10] sm:$0xff]
        %v257 = vld [vmem:[%s250 + $0x18] sm:$0xff]
        %v258 = vld [vmem:[%s250 + $0x20] sm:$0xff]
        %v259 = vld [vmem:[%s250 + $0x28] sm:$0xff]
        %v260 = vld [vmem:[%s250 + $0x30] sm:$0xff]
        %v261 = vld [vmem:[%s250 + $0x38] sm:$0xff]
        %v262 = vld [vmem:[%s250 + $0x40] sm:$0xff]
        %v263 = vld [vmem:[%s250 + $0x48] sm:$0xff]
        %v264 = vld [vmem:[%s250 + $0x50] sm:$0xff]
        %v265 = vld [vmem:[%s250 + $0x58] sm:$0xff]
        %v266 = vld [vmem:[%s250 + $0x60] sm:$0xff]
        %v267 = vld [vmem:[%s250 + $0x68] sm:$0xff]
        %v268 = vld [vmem:[%s250 + $0x70] sm:$0xff]
        %v269 = vld [vmem:[%s250 + $0x78] sm:$0xff]
        %v270 = vpack.c.bf16 %v255, %v254
        %v271 = vpack.c.bf16 %v257, %v256
        %v272 = vpack.c.bf16 %v259, %v258
        %v273 = vpack.c.bf16 %v261, %v260
        %v274 = vpack.c.bf16 %v263, %v262
        %v275 = vpack.c.bf16 %v265, %v264
        %v276 = vpack.c.bf16 %v267, %v266
        %v277 = vpack.c.bf16 %v269, %v268
        %v278 = vld [vmem:[%s1] sm:$0xf]
        %v279 = vld [vmem:[%s1 + $0x4] sm:$0xf]
        %v280 = vld [vmem:[%s1 + $0x8] sm:$0xf]
        %v281 = vld [vmem:[%s1 + $0xc] sm:$0xf]
        %v282 = vld [vmem:[%s4] sm:$0x1]
        %v283 = vlaneseq
        %v284 = vshrl.u32 %v283, 7
        %v285 = vsub.s32 0, %v284
        %v286 = vrot.slane %v282, %v285
        %v291 = vunpack.c.l.b16 %v278
        %v292 = vunpack.c.l.b16 %v279
        %v293 = vunpack.c.l.b16 %v280
        %v294 = vunpack.c.l.b16 %v281
        %v295 = vpack.c.b16 %v292, %v291
        %v296 = vpack.c.b16 %v294, %v293
        %vm299 = vcmask 261120
        %v301 = vsel %vm299, %v270, 0
        %v304 = vsel %vm299, %v271, 0
        %v307 = vsel %vm299, %v272, 0
        %v310 = vsel %vm299, %v273, 0
        %v313 = vsel %vm299, %v274, 0
        %v316 = vsel %vm299, %v275, 0
        %v319 = vsel %vm299, %v276, 0
        %v322 = vsel %vm299, %v277, 0
        %324 = vmatprep.subr.bf16.mxu0 0
        %325 = vmatpush1.bf16.msra.mxu0 0
        %326 = vmatprep.subr.bf16.mxu0 0
        %327 = vmatpush1.bf16.msra.mxu0 0
        %328 = vmatprep.subr.bf16.mxu0 0
        %329 = vmatpush1.bf16.msra.mxu0 0
        %330 = vmatprep.subr.bf16.mxu0 0
        %331 = vmatpush1.bf16.msra.mxu0 0
        %332 = vmatprep.subr.bf16.mxu0 0
        %333 = vmatpush1.bf16.msra.mxu0 0
        %334 = vmatprep.subr.bf16.mxu0 0
        %335 = vmatpush1.bf16.msra.mxu0 0
        %336 = vmatprep.subr.bf16.mxu0 0
        %337 = vmatpush1.bf16.msra.mxu0 %v296
        %338 = vmatprep.subr.bf16.mxu0 0
        %339 = vmatpush1.bf16.msra.mxu0 %v295
        %340 = vmatprep.subr.bf16.mxu0 0
        %341 = vmatpush2.bf16.msra.mxu0 0
        %342 = vmatprep.subr.bf16.mxu0 0
        %343 = vmatpush2.bf16.msra.mxu0 0
        %344 = vmatprep.subr.bf16.mxu0 0
        %345 = vmatpush2.bf16.msra.mxu0 0
        %346 = vmatprep.subr.bf16.mxu0 0
        %347 = vmatpush2.bf16.msra.mxu0 0
        %348 = vmatprep.subr.bf16.mxu0 0
        %349 = vmatpush2.bf16.msra.mxu0 0
        %350 = vmatprep.subr.bf16.mxu0 0
        %351 = vmatpush2.bf16.msra.mxu0 0
        %352 = vmatprep.subr.bf16.mxu0 0
        %353 = vmatpush2.bf16.msra.mxu0 0
        %354 = vmatprep.subr.bf16.mxu0 0
        %355 = vmatpush2.bf16.msra.mxu0 0
        %356 = vmatprep.mubr.bf16.mxu0 0
        %357 = vmatmul.mubr.bf16.gmra.mxu0 %v301
        %v358 = vpop.f32.mrf.mxu0
        %v359 = vadd.f32 %v286, %v358
        %v360 = vpop.f32.mrf.mxu0
        %v361 = vpop.f32.mrf.mxu0
        %v362 = vadd.f32 %v286, %v361
        %v363 = vpop.f32.mrf.mxu0
        %364 = vmatprep.mubr.bf16.mxu0 0
        %365 = vmatmul.mubr.bf16.gmra.mxu0 %v304
        %v366 = vpop.f32.mrf.mxu0
        %v367 = vadd.f32 %v286, %v366
        %v368 = vpop.f32.mrf.mxu0
        %v369 = vpop.f32.mrf.mxu0
        %v370 = vadd.f32 %v286, %v369
        %v371 = vpop.f32.mrf.mxu0
        %372 = vmatprep.mubr.bf16.mxu0 0
        %373 = vmatmul.mubr.bf16.gmra.mxu0 %v307
        %v374 = vpop.f32.mrf.mxu0
        %v375 = vadd.f32 %v286, %v374
        %v376 = vpop.f32.mrf.mxu0
        %v377 = vpop.f32.mrf.mxu0
        %v378 = vadd.f32 %v286, %v377
        %v379 = vpop.f32.mrf.mxu0
        %380 = vmatprep.mubr.bf16.mxu0 0
        %381 = vmatmul.mubr.bf16.gmra.mxu0 %v310
        %v382 = vpop.f32.mrf.mxu0
        %v383 = vadd.f32 %v286, %v382
        %v384 = vpop.f32.mrf.mxu0
        %v385 = vpop.f32.mrf.mxu0
        %v386 = vadd.f32 %v286, %v385
        %v387 = vpop.f32.mrf.mxu0
        %388 = vmatprep.mubr.bf16.mxu0 0
        %389 = vmatmul.mubr.bf16.gmra.mxu0 %v313
        %v390 = vpop.f32.mrf.mxu0
        %v391 = vadd.f32 %v286, %v390
        %v392 = vpop.f32.mrf.mxu0
        %v393 = vpop.f32.mrf.mxu0
        %v394 = vadd.f32 %v286, %v393
        %v395 = vpop.f32.mrf.mxu0
        %396 = vmatprep.mubr.bf16.mxu0 0
        %397 = vmatmul.mubr.bf16.gmra.mxu0 %v316
        %v398 = vpop.f32.mrf.mxu0
        %v399 = vadd.f32 %v286, %v398
        %v400 = vpop.f32.mrf.mxu0
        %v401 = vpop.f32.mrf.mxu0
        %v402 = vadd.f32 %v286, %v401
        %v403 = vpop.f32.mrf.mxu0
        %404 = vmatprep.mubr.bf16.mxu0 0
        %405 = vmatmul.mubr.bf16.gmra.mxu0 %v319
        %v406 = vpop.f32.mrf.mxu0
        %v407 = vadd.f32 %v286, %v406
        %v408 = vpop.f32.mrf.mxu0
        %v409 = vpop.f32.mrf.mxu0
        %v410 = vadd.f32 %v286, %v409
        %v411 = vpop.f32.mrf.mxu0
        %412 = vmatprep.mubr.bf16.mxu0 0
        %413 = vmatmul.mubr.bf16.gmra.mxu0 %v322
        %v414 = vpop.f32.mrf.mxu0
        %v415 = vadd.f32 %v286, %v414
        %v416 = vpop.f32.mrf.mxu0
        %v417 = vpop.f32.mrf.mxu0
        %v418 = vadd.f32 %v286, %v417
        %v419 = vpop.f32.mrf.mxu0
        %420 = vdwg.mxu0
        %v421 = vpack.c.bf16 %v362, %v359
        %v422 = vpack.c.bf16 %v370, %v367
        %v423 = vpack.c.bf16 %v378, %v375
        %v424 = vpack.c.bf16 %v386, %v383
        %v425 = vpack.c.bf16 %v394, %v391
        %v426 = vpack.c.bf16 %v402, %v399
        %v427 = vpack.c.bf16 %v410, %v407
        %v428 = vpack.c.bf16 %v418, %v415
        %v429 = vld [vmem:[%s2] sm:$0xf]
        %v430 = vld [vmem:[%s2 + $0x4] sm:$0xf]
        %v431 = vld [vmem:[%s2 + $0x8] sm:$0xf]
        %v432 = vld [vmem:[%s2 + $0xc] sm:$0xf]
        %v433 = vld [vmem:[%s2 + $0x10] sm:$0xf]
        %v434 = vld [vmem:[%s2 + $0x14] sm:$0xf]
        %v435 = vld [vmem:[%s2 + $0x18] sm:$0xf]
        %v436 = vld [vmem:[%s2 + $0x1c] sm:$0xf]
        %v437 = vld [vmem:[%s2 + $0x20] sm:$0xf]
        %v438 = vld [vmem:[%s2 + $0x24] sm:$0xf]
        %v439 = vld [vmem:[%s2 + $0x28] sm:$0xf]
        %v440 = vld [vmem:[%s2 + $0x2c] sm:$0xf]
        %v441 = vld [vmem:[%s2 + $0x30] sm:$0xf]
        %v442 = vld [vmem:[%s2 + $0x34] sm:$0xf]
        %v443 = vld [vmem:[%s2 + $0x38] sm:$0xf]
        %v444 = vld [vmem:[%s2 + $0x3c] sm:$0xf]
        %v445 = vld [vmem:[%s4 + $0x1] sm:$0x1]
        %v446 = vlaneseq
        %v447 = vshrl.u32 %v446, 7
        %v448 = vsub.s32 0, %v447
        %v449 = vrot.slane %v445, %v448
        %v466 = vunpack.c.l.b16 %v429
        %v467 = vunpack.c.l.b16 %v430
        %v468 = vunpack.c.l.b16 %v431
        %v469 = vunpack.c.l.b16 %v432
        %v470 = vunpack.c.l.b16 %v433
        %v471 = vunpack.c.l.b16 %v434
        %v472 = vunpack.c.l.b16 %v435
        %v473 = vunpack.c.l.b16 %v436
        %v474 = vunpack.c.l.b16 %v437
        %v475 = vunpack.c.l.b16 %v438
        %v476 = vunpack.c.l.b16 %v439
        %v477 = vunpack.c.l.b16 %v440
        %v478 = vunpack.c.l.b16 %v441
        %v479 = vunpack.c.l.b16 %v442
        %v480 = vunpack.c.l.b16 %v443
        %v481 = vunpack.c.l.b16 %v444
        %v482 = vpack.c.b16 %v467, %v466
        %v483 = vpack.c.b16 %v469, %v468
        %v484 = vpack.c.b16 %v471, %v470
        %v485 = vpack.c.b16 %v473, %v472
        %v486 = vpack.c.b16 %v475, %v474
        %v487 = vpack.c.b16 %v477, %v476
        %v488 = vpack.c.b16 %v479, %v478
        %v489 = vpack.c.b16 %v481, %v480
        %498 = vmatprep.subr.bf16.mxu0 0
        %499 = vmatpush1.bf16.msra.mxu0 %v489
        %500 = vmatprep.subr.bf16.mxu0 0
        %501 = vmatpush1.bf16.msra.mxu0 %v488
        %502 = vmatprep.subr.bf16.mxu0 0
        %503 = vmatpush1.bf16.msra.mxu0 %v487
        %504 = vmatprep.subr.bf16.mxu0 0
        %505 = vmatpush1.bf16.msra.mxu0 %v486
        %506 = vmatprep.subr.bf16.mxu0 0
        %507 = vmatpush1.bf16.msra.mxu0 %v485
        %508 = vmatprep.subr.bf16.mxu0 0
        %509 = vmatpush1.bf16.msra.mxu0 %v484
        %510 = vmatprep.subr.bf16.mxu0 0
        %511 = vmatpush1.bf16.msra.mxu0 %v483
        %512 = vmatprep.subr.bf16.mxu0 0
        %513 = vmatpush1.bf16.msra.mxu0 %v482
        %514 = vmatprep.subr.bf16.mxu0 0
        %515 = vmatpush2.bf16.msra.mxu0 0
        %516 = vmatprep.subr.bf16.mxu0 0
        %517 = vmatpush2.bf16.msra.mxu0 0
        %518 = vmatprep.subr.bf16.mxu0 0
        %519 = vmatpush2.bf16.msra.mxu0 0
        %520 = vmatprep.subr.bf16.mxu0 0
        %521 = vmatpush2.bf16.msra.mxu0 0
        %522 = vmatprep.subr.bf16.mxu0 0
        %523 = vmatpush2.bf16.msra.mxu0 0
        %524 = vmatprep.subr.bf16.mxu0 0
        %525 = vmatpush2.bf16.msra.mxu0 0
        %526 = vmatprep.subr.bf16.mxu0 0
        %527 = vmatpush2.bf16.msra.mxu0 0
        %528 = vmatprep.subr.bf16.mxu0 0
        %529 = vmatpush2.bf16.msra.mxu0 0
        %530 = vmatprep.mubr.bf16.mxu0 0
        %531 = vmatmul.mubr.bf16.gmra.mxu0 %v421
        %v532 = vpop.f32.mrf.mxu0
        %v533 = vadd.f32 %v449, %v532
        %v534 = vpop.f32.mrf.mxu0
        %v535 = vpop.f32.mrf.mxu0
        %v536 = vadd.f32 %v449, %v535
        %v537 = vpop.f32.mrf.mxu0
        %538 = vmatprep.mubr.bf16.mxu0 0
        %539 = vmatmul.mubr.bf16.gmra.mxu0 %v422
        %v540 = vpop.f32.mrf.mxu0
        %v541 = vadd.f32 %v449, %v540
        %v542 = vpop.f32.mrf.mxu0
        %v543 = vpop.f32.mrf.mxu0
        %v544 = vadd.f32 %v449, %v543
        %v545 = vpop.f32.mrf.mxu0
        %546 = vmatprep.mubr.bf16.mxu0 0
        %547 = vmatmul.mubr.bf16.gmra.mxu0 %v423
        %v548 = vpop.f32.mrf.mxu0
        %v549 = vadd.f32 %v449, %v548
        %v550 = vpop.f32.mrf.mxu0
        %v551 = vpop.f32.mrf.mxu0
        %v552 = vadd.f32 %v449, %v551
        %v553 = vpop.f32.mrf.mxu0
        %554 = vmatprep.mubr.bf16.mxu0 0
        %555 = vmatmul.mubr.bf16.gmra.mxu0 %v424
        %v556 = vpop.f32.mrf.mxu0
        %v557 = vadd.f32 %v449, %v556
        %v558 = vpop.f32.mrf.mxu0
        %v559 = vpop.f32.mrf.mxu0
        %v560 = vadd.f32 %v449, %v559
        %v561 = vpop.f32.mrf.mxu0
        %562 = vmatprep.mubr.bf16.mxu0 0
        %563 = vmatmul.mubr.bf16.gmra.mxu0 %v425
        %v564 = vpop.f32.mrf.mxu0
        %v565 = vadd.f32 %v449, %v564
        %v566 = vpop.f32.mrf.mxu0
        %v567 = vpop.f32.mrf.mxu0
        %v568 = vadd.f32 %v449, %v567
        %v569 = vpop.f32.mrf.mxu0
        %570 = vmatprep.mubr.bf16.mxu0 0
        %571 = vmatmul.mubr.bf16.gmra.mxu0 %v426
        %v572 = vpop.f32.mrf.mxu0
        %v573 = vadd.f32 %v449, %v572
        %v574 = vpop.f32.mrf.mxu0
        %v575 = vpop.f32.mrf.mxu0
        %v576 = vadd.f32 %v449, %v575
        %v577 = vpop.f32.mrf.mxu0
        %578 = vmatprep.mubr.bf16.mxu0 0
        %579 = vmatmul.mubr.bf16.gmra.mxu0 %v427
        %v580 = vpop.f32.mrf.mxu0
        %v581 = vadd.f32 %v449, %v580
        %v582 = vpop.f32.mrf.mxu0
        %v583 = vpop.f32.mrf.mxu0
        %v584 = vadd.f32 %v449, %v583
        %v585 = vpop.f32.mrf.mxu0
        %586 = vmatprep.mubr.bf16.mxu0 0
        %587 = vmatmul.mubr.bf16.gmra.mxu0 %v428
        %v588 = vpop.f32.mrf.mxu0
        %v589 = vadd.f32 %v449, %v588
        %v590 = vpop.f32.mrf.mxu0
        %v591 = vpop.f32.mrf.mxu0
        %v592 = vadd.f32 %v449, %v591
        %v593 = vpop.f32.mrf.mxu0
        %594 = vdwg.mxu0
        %v595 = vpack.c.bf16 %v536, %v533
        %v596 = vpack.c.bf16 %v544, %v541
        %v597 = vpack.c.bf16 %v552, %v549
        %v598 = vpack.c.bf16 %v560, %v557
        %v599 = vpack.c.bf16 %v568, %v565
        %v600 = vpack.c.bf16 %v576, %v573
        %v601 = vpack.c.bf16 %v584, %v581
        %v602 = vpack.c.bf16 %v592, %v589
        %s603 = scalar_lea.vmem %s2, 64
        %v604 = vld [vmem:[%s603] sm:$0xf]
        %v605 = vld [vmem:[%s603 + $0x4] sm:$0xf]
        %v606 = vld [vmem:[%s603 + $0x8] sm:$0xf]
        %v607 = vld [vmem:[%s603 + $0xc] sm:$0xf]
        %v608 = vld [vmem:[%s603 + $0x10] sm:$0xf]
        %v609 = vld [vmem:[%s603 + $0x14] sm:$0xf]
        %v610 = vld [vmem:[%s603 + $0x18] sm:$0xf]
        %v611 = vld [vmem:[%s603 + $0x1c] sm:$0xf]
        %v612 = vld [vmem:[%s603 + $0x20] sm:$0xf]
        %v613 = vld [vmem:[%s603 + $0x24] sm:$0xf]
        %v614 = vld [vmem:[%s603 + $0x28] sm:$0xf]
        %v615 = vld [vmem:[%s603 + $0x2c] sm:$0xf]
        %v616 = vld [vmem:[%s603 + $0x30] sm:$0xf]
        %v617 = vld [vmem:[%s603 + $0x34] sm:$0xf]
        %v618 = vld [vmem:[%s603 + $0x38] sm:$0xf]
        %v619 = vld [vmem:[%s603 + $0x3c] sm:$0xf]
        %v620 = vld [vmem:[%s4 + $0x2] sm:$0x1]
        %v621 = vlaneseq
        %v622 = vshrl.u32 %v621, 7
        %v623 = vsub.s32 0, %v622
        %v624 = vrot.slane %v620, %v623
        %v641 = vunpack.c.l.b16 %v604
        %v642 = vunpack.c.l.b16 %v605
        %v643 = vunpack.c.l.b16 %v606
        %v644 = vunpack.c.l.b16 %v607
        %v645 = vunpack.c.l.b16 %v608
        %v646 = vunpack.c.l.b16 %v609
        %v647 = vunpack.c.l.b16 %v610
        %v648 = vunpack.c.l.b16 %v611
        %v649 = vunpack.c.l.b16 %v612
        %v650 = vunpack.c.l.b16 %v613
        %v651 = vunpack.c.l.b16 %v614
        %v652 = vunpack.c.l.b16 %v615
        %v653 = vunpack.c.l.b16 %v616
        %v654 = vunpack.c.l.b16 %v617
        %v655 = vunpack.c.l.b16 %v618
        %v656 = vunpack.c.l.b16 %v619
        %v657 = vpack.c.b16 %v642, %v641
        %v658 = vpack.c.b16 %v644, %v643
        %v659 = vpack.c.b16 %v646, %v645
        %v660 = vpack.c.b16 %v648, %v647
        %v661 = vpack.c.b16 %v650, %v649
        %v662 = vpack.c.b16 %v652, %v651
        %v663 = vpack.c.b16 %v654, %v653
        %v664 = vpack.c.b16 %v656, %v655
        %673 = vmatprep.subr.bf16.mxu0 0
        %674 = vmatpush1.bf16.msra.mxu0 %v664
        %675 = vmatprep.subr.bf16.mxu0 0
        %676 = vmatpush1.bf16.msra.mxu0 %v663
        %677 = vmatprep.subr.bf16.mxu0 0
        %678 = vmatpush1.bf16.msra.mxu0 %v662
        %679 = vmatprep.subr.bf16.mxu0 0
        %680 = vmatpush1.bf16.msra.mxu0 %v661
        %681 = vmatprep.subr.bf16.mxu0 0
        %682 = vmatpush1.bf16.msra.mxu0 %v660
        %683 = vmatprep.subr.bf16.mxu0 0
        %684 = vmatpush1.bf16.msra.mxu0 %v659
        %685 = vmatprep.subr.bf16.mxu0 0
        %686 = vmatpush1.bf16.msra.mxu0 %v658
        %687 = vmatprep.subr.bf16.mxu0 0
        %688 = vmatpush1.bf16.msra.mxu0 %v657
        %689 = vmatprep.subr.bf16.mxu0 0
        %690 = vmatpush2.bf16.msra.mxu0 0
        %691 = vmatprep.subr.bf16.mxu0 0
        %692 = vmatpush2.bf16.msra.mxu0 0
        %693 = vmatprep.subr.bf16.mxu0 0
        %694 = vmatpush2.bf16.msra.mxu0 0
        %695 = vmatprep.subr.bf16.mxu0 0
        %696 = vmatpush2.bf16.msra.mxu0 0
        %697 = vmatprep.subr.bf16.mxu0 0
        %698 = vmatpush2.bf16.msra.mxu0 0
        %699 = vmatprep.subr.bf16.mxu0 0
        %700 = vmatpush2.bf16.msra.mxu0 0
        %701 = vmatprep.subr.bf16.mxu0 0
        %702 = vmatpush2.bf16.msra.mxu0 0
        %703 = vmatprep.subr.bf16.mxu0 0
        %704 = vmatpush2.bf16.msra.mxu0 0
        %705 = vmatprep.mubr.bf16.mxu0 0
        %706 = vmatmul.mubr.bf16.gmra.mxu0 %v595
        %v707 = vpop.f32.mrf.mxu0
        %v708 = vadd.f32 %v624, %v707
        %v709 = vpop.f32.mrf.mxu0
        %v710 = vpop.f32.mrf.mxu0
        %v711 = vadd.f32 %v624, %v710
        %v712 = vpop.f32.mrf.mxu0
        %713 = vmatprep.mubr.bf16.mxu0 0
        %714 = vmatmul.mubr.bf16.gmra.mxu0 %v596
        %v715 = vpop.f32.mrf.mxu0
        %v716 = vadd.f32 %v624, %v715
        %v717 = vpop.f32.mrf.mxu0
        %v718 = vpop.f32.mrf.mxu0
        %v719 = vadd.f32 %v624, %v718
        %v720 = vpop.f32.mrf.mxu0
        %721 = vmatprep.mubr.bf16.mxu0 0
        %722 = vmatmul.mubr.bf16.gmra.mxu0 %v597
        %v723 = vpop.f32.mrf.mxu0
        %v724 = vadd.f32 %v624, %v723
        %v725 = vpop.f32.mrf.mxu0
        %v726 = vpop.f32.mrf.mxu0
        %v727 = vadd.f32 %v624, %v726
        %v728 = vpop.f32.mrf.mxu0
        %729 = vmatprep.mubr.bf16.mxu0 0
        %730 = vmatmul.mubr.bf16.gmra.mxu0 %v598
        %v731 = vpop.f32.mrf.mxu0
        %v732 = vadd.f32 %v624, %v731
        %v733 = vpop.f32.mrf.mxu0
        %v734 = vpop.f32.mrf.mxu0
        %v735 = vadd.f32 %v624, %v734
        %v736 = vpop.f32.mrf.mxu0
        %737 = vmatprep.mubr.bf16.mxu0 0
        %738 = vmatmul.mubr.bf16.gmra.mxu0 %v599
        %v739 = vpop.f32.mrf.mxu0
        %v740 = vadd.f32 %v624, %v739
        %v741 = vpop.f32.mrf.mxu0
        %v742 = vpop.f32.mrf.mxu0
        %v743 = vadd.f32 %v624, %v742
        %v744 = vpop.f32.mrf.mxu0
        %745 = vmatprep.mubr.bf16.mxu0 0
        %746 = vmatmul.mubr.bf16.gmra.mxu0 %v600
        %v747 = vpop.f32.mrf.mxu0
        %v748 = vadd.f32 %v624, %v747
        %v749 = vpop.f32.mrf.mxu0
        %v750 = vpop.f32.mrf.mxu0
        %v751 = vadd.f32 %v624, %v750
        %v752 = vpop.f32.mrf.mxu0
        %753 = vmatprep.mubr.bf16.mxu0 0
        %754 = vmatmul.mubr.bf16.gmra.mxu0 %v601
        %v755 = vpop.f32.mrf.mxu0
        %v756 = vadd.f32 %v624, %v755
        %v757 = vpop.f32.mrf.mxu0
        %v758 = vpop.f32.mrf.mxu0
        %v759 = vadd.f32 %v624, %v758
        %v760 = vpop.f32.mrf.mxu0
        %761 = vmatprep.mubr.bf16.mxu0 0
        %762 = vmatmul.mubr.bf16.gmra.mxu0 %v602
        %v763 = vpop.f32.mrf.mxu0
        %v764 = vadd.f32 %v624, %v763
        %v765 = vpop.f32.mrf.mxu0
        %v766 = vpop.f32.mrf.mxu0
        %v767 = vadd.f32 %v624, %v766
        %v768 = vpop.f32.mrf.mxu0
        %769 = vdwg.mxu0
        %v770 = vpack.c.bf16 %v711, %v708
        %v771 = vpack.c.bf16 %v719, %v716
        %v772 = vpack.c.bf16 %v727, %v724
        %v773 = vpack.c.bf16 %v735, %v732
        %v774 = vpack.c.bf16 %v743, %v740
        %v775 = vpack.c.bf16 %v751, %v748
        %v776 = vpack.c.bf16 %v759, %v756
        %v777 = vpack.c.bf16 %v767, %v764
        %v778 = vld [vmem:[%s3] sm:$0xf]
        %v779 = vld [vmem:[%s3 + $0x4] sm:$0xf]
        %v780 = vld [vmem:[%s3 + $0x8] sm:$0xf]
        %v781 = vld [vmem:[%s3 + $0xc] sm:$0xf]
        %v782 = vld [vmem:[%s3 + $0x10] sm:$0xf]
        %v783 = vld [vmem:[%s3 + $0x14] sm:$0xf]
        %v784 = vld [vmem:[%s3 + $0x18] sm:$0xf]
        %v785 = vld [vmem:[%s3 + $0x1c] sm:$0xf]
        %v786 = vld [vmem:[%s3 + $0x20] sm:$0xf]
        %v787 = vld [vmem:[%s3 + $0x24] sm:$0xf]
        %v788 = vld [vmem:[%s3 + $0x28] sm:$0xf]
        %v789 = vld [vmem:[%s3 + $0x2c] sm:$0xf]
        %v790 = vld [vmem:[%s3 + $0x30] sm:$0xf]
        %v791 = vld [vmem:[%s3 + $0x34] sm:$0xf]
        %v792 = vld [vmem:[%s3 + $0x38] sm:$0xf]
        %v793 = vld [vmem:[%s3 + $0x3c] sm:$0xf]
        %v794 = vld [vmem:[%s5] sm:$0x1]
        %v796 = vlaneseq
        %v797 = vshrl.u32 %v796, 7
        %v798 = vsub.s32 0, %v797
        %v799 = vrot.slane %v794, %v798
        %v817 = vunpack.c.l.b16 %v778
        %v818 = vunpack.c.l.b16 %v779
        %v819 = vunpack.c.l.b16 %v780
        %v820 = vunpack.c.l.b16 %v781
        %v821 = vunpack.c.l.b16 %v782
        %v822 = vunpack.c.l.b16 %v783
        %v823 = vunpack.c.l.b16 %v784
        %v824 = vunpack.c.l.b16 %v785
        %v825 = vunpack.c.l.b16 %v786
        %v826 = vunpack.c.l.b16 %v787
        %v827 = vunpack.c.l.b16 %v788
        %v828 = vunpack.c.l.b16 %v789
        %v829 = vunpack.c.l.b16 %v790
        %v830 = vunpack.c.l.b16 %v791
        %v831 = vunpack.c.l.b16 %v792
        %v832 = vunpack.c.l.b16 %v793
        %v833 = vpack.c.b16 %v818, %v817
        %v834 = vpack.c.b16 %v820, %v819
        %v835 = vpack.c.b16 %v822, %v821
        %v836 = vpack.c.b16 %v824, %v823
        %v837 = vpack.c.b16 %v826, %v825
        %v838 = vpack.c.b16 %v828, %v827
        %v839 = vpack.c.b16 %v830, %v829
        %v840 = vpack.c.b16 %v832, %v831
        %849 = vmatprep.subr.bf16.mxu0 0
        %850 = vmatpush1.bf16.msra.mxu0 %v840
        %851 = vmatprep.subr.bf16.mxu0 0
        %852 = vmatpush1.bf16.msra.mxu0 %v839
        %853 = vmatprep.subr.bf16.mxu0 0
        %854 = vmatpush1.bf16.msra.mxu0 %v838
        %855 = vmatprep.subr.bf16.mxu0 0
        %856 = vmatpush1.bf16.msra.mxu0 %v837
        %857 = vmatprep.subr.bf16.mxu0 0
        %858 = vmatpush1.bf16.msra.mxu0 %v836
        %859 = vmatprep.subr.bf16.mxu0 0
        %860 = vmatpush1.bf16.msra.mxu0 %v835
        %861 = vmatprep.subr.bf16.mxu0 0
        %862 = vmatpush1.bf16.msra.mxu0 %v834
        %863 = vmatprep.subr.bf16.mxu0 0
        %864 = vmatpush1.bf16.msra.mxu0 %v833
        %865 = vmatprep.subr.bf16.mxu0 0
        %866 = vmatpush2.bf16.msra.mxu0 0
        %867 = vmatprep.subr.bf16.mxu0 0
        %868 = vmatpush2.bf16.msra.mxu0 0
        %869 = vmatprep.subr.bf16.mxu0 0
        %870 = vmatpush2.bf16.msra.mxu0 0
        %871 = vmatprep.subr.bf16.mxu0 0
        %872 = vmatpush2.bf16.msra.mxu0 0
        %873 = vmatprep.subr.bf16.mxu0 0
        %874 = vmatpush2.bf16.msra.mxu0 0
        %875 = vmatprep.subr.bf16.mxu0 0
        %876 = vmatpush2.bf16.msra.mxu0 0
        %877 = vmatprep.subr.bf16.mxu0 0
        %878 = vmatpush2.bf16.msra.mxu0 0
        %879 = vmatprep.subr.bf16.mxu0 0
        %880 = vmatpush2.bf16.msra.mxu0 0
        %881 = vmatprep.mubr.bf16.mxu0 0
        %882 = vmatmul.mubr.bf16.gmra.mxu0 %v770
        %v883 = vpop.f32.mrf.mxu0
        %v884 = vadd.f32 %v799, %v883
        %v885 = vpop.f32.mrf.mxu0
        %v886 = vpop.f32.mrf.mxu0
        %v887 = vadd.f32 %v799, %v886
        %v888 = vpop.f32.mrf.mxu0
        %889 = vmatprep.mubr.bf16.mxu0 0
        %890 = vmatmul.mubr.bf16.gmra.mxu0 %v771
        %v891 = vpop.f32.mrf.mxu0
        %v892 = vadd.f32 %v799, %v891
        %v893 = vpop.f32.mrf.mxu0
        %v894 = vpop.f32.mrf.mxu0
        %v895 = vadd.f32 %v799, %v894
        %v896 = vpop.f32.mrf.mxu0
        %897 = vmatprep.mubr.bf16.mxu0 0
        %898 = vmatmul.mubr.bf16.gmra.mxu0 %v772
        %v899 = vpop.f32.mrf.mxu0
        %v900 = vadd.f32 %v799, %v899
        %v901 = vpop.f32.mrf.mxu0
        %v902 = vpop.f32.mrf.mxu0
        %v903 = vadd.f32 %v799, %v902
        %v904 = vpop.f32.mrf.mxu0
        %905 = vmatprep.mubr.bf16.mxu0 0
        %906 = vmatmul.mubr.bf16.gmra.mxu0 %v773
        %v907 = vpop.f32.mrf.mxu0
        %v908 = vadd.f32 %v799, %v907
        %v909 = vpop.f32.mrf.mxu0
        %v910 = vpop.f32.mrf.mxu0
        %v911 = vadd.f32 %v799, %v910
        %v912 = vpop.f32.mrf.mxu0
        %913 = vmatprep.mubr.bf16.mxu0 0
        %914 = vmatmul.mubr.bf16.gmra.mxu0 %v774
        %v915 = vpop.f32.mrf.mxu0
        %v916 = vadd.f32 %v799, %v915
        %v917 = vpop.f32.mrf.mxu0
        %v918 = vpop.f32.mrf.mxu0
        %v919 = vadd.f32 %v799, %v918
        %v920 = vpop.f32.mrf.mxu0
        %921 = vmatprep.mubr.bf16.mxu0 0
        %922 = vmatmul.mubr.bf16.gmra.mxu0 %v775
        %v923 = vpop.f32.mrf.mxu0
        %v924 = vadd.f32 %v799, %v923
        %v925 = vpop.f32.mrf.mxu0
        %v926 = vpop.f32.mrf.mxu0
        %v927 = vadd.f32 %v799, %v926
        %v928 = vpop.f32.mrf.mxu0
        %929 = vmatprep.mubr.bf16.mxu0 0
        %930 = vmatmul.mubr.bf16.gmra.mxu0 %v776
        %v931 = vpop.f32.mrf.mxu0
        %v932 = vadd.f32 %v799, %v931
        %v933 = vpop.f32.mrf.mxu0
        %v934 = vpop.f32.mrf.mxu0
        %v935 = vadd.f32 %v799, %v934
        %v936 = vpop.f32.mrf.mxu0
        %937 = vmatprep.mubr.bf16.mxu0 0
        %938 = vmatmul.mubr.bf16.gmra.mxu0 %v777
        %v939 = vpop.f32.mrf.mxu0
        %v940 = vadd.f32 %v799, %v939
        %v941 = vpop.f32.mrf.mxu0
        %v942 = vpop.f32.mrf.mxu0
        %v943 = vadd.f32 %v799, %v942
        %v944 = vpop.f32.mrf.mxu0
        %945 = vdwg.mxu0
        %946 = vst [vmem:[%s245] sm:$0xff] %v884
        %947 = vst [vmem:[%s245 + $0x8] sm:$0xff] %v887
        %948 = vst [vmem:[%s245 + $0x10] sm:$0xff] %v892
        %949 = vst [vmem:[%s245 + $0x18] sm:$0xff] %v895
        %950 = vst [vmem:[%s245 + $0x20] sm:$0xff] %v900
        %951 = vst [vmem:[%s245 + $0x28] sm:$0xff] %v903
        %952 = vst [vmem:[%s245 + $0x30] sm:$0xff] %v908
        %953 = vst [vmem:[%s245 + $0x38] sm:$0xff] %v911
        %954 = vst [vmem:[%s245 + $0x40] sm:$0xff] %v916
        %955 = vst [vmem:[%s245 + $0x48] sm:$0xff] %v919
        %956 = vst [vmem:[%s245 + $0x50] sm:$0xff] %v924
        %957 = vst [vmem:[%s245 + $0x58] sm:$0xff] %v927
        %958 = vst [vmem:[%s245 + $0x60] sm:$0xff] %v932
        %959 = vst [vmem:[%s245 + $0x68] sm:$0xff] %v935
        %960 = vst [vmem:[%s245 + $0x70] sm:$0xff] %v940
        %961 = vst [vmem:[%s245 + $0x78] sm:$0xff] %v943
        %s962 = sand.u32 %s159, 1
        %s963 = scalar_lea.sflag [#allocation3], %s962
        %s964 = sand.u32 %s159, 1
        %s965 = smul.addr %s964, 128
        %s966 = scalar_lea.vmem [#allocation2], %s965
        // Predicated region
        $region45: #{tpu_custom_call.1} parent=43 // pred_check
          %p967 = pneg %p169
        $region46: #{tpu_custom_call.1} parent=43 // pred_check_branch
          %969 = sbr.rel (%p967) target = $region48
        $region47: #{tpu_custom_call.1} parent=43 // pred_region
          %s970 = smul.u32 16, %s20
          %s972 = ssub.s32 2048, 2048
          %973 = vsyncadd %s963, %s972
          %s974 = smul.addr %s970, 128
          %s975 = scalar_lea.hbm %s6, %s974
          %s976 = sshll.u32 %s966, 4
          %s977 = int_to_ptr.vmem [resolvable:$true] %s976
          %982 = dma.vmem_to_hbm [thread:$0]  %s977, 2048, %s975, %s963, 128, 128, 8
        $region48: #{tpu_custom_call.1} parent=43 // pred_fallthru
          _
      $region44: #{tpu_custom_call.1} parent=5 // pred_fallthru
        _
      %p983 = scmp.le.s32.totalorder 2, %s15
      // Predicated region
      $region49: #{tpu_custom_call.1} parent=5 // pred_check
        %p984 = pneg %p983
      $region50: #{tpu_custom_call.1} parent=5 // pred_check_branch
        %986 = sbr.rel (%p984) target = $region52
      $region51: #{tpu_custom_call.1} parent=5 // pred_region
        %s987 = ssub.s32 %s15, 2
        // Predicated region
        $region53: #{tpu_custom_call.1} parent=51 // pred_check
          %p988 = pneg %p175
        $region54: #{tpu_custom_call.1} parent=51 // pred_check_branch
          %990 = sbr.rel (%p988) target = $region56
        $region55: #{tpu_custom_call.1} parent=51 // pred_region
          %s991 = sand.u32 %s160, 1
          %s992 = scalar_lea.sflag [#allocation3], %s991
          %s993 = sand.u32 %s160, 1
          %s994 = smul.addr %s993, 128
          %s995 = scalar_lea.vmem [#allocation2], %s994
          %996 = dma.done %s992, 2048
        $region56: #{tpu_custom_call.1} parent=51 // pred_fallthru
          _
      $region52: #{tpu_custom_call.1} parent=5 // pred_fallthru
        _
    $region6: #{tpu_custom_call.1} parent=1 // loop_footer
      %s19 = sadd.s32 1, %s15
    $region7: #{tpu_custom_call.1} parent=1 // loop_footer_branch
      %14 = sbr.rel target = $region3
    $region8: #{tpu_custom_call.1} parent=1 // loop_exit
      _
    %997 = vsyncpa [#allocation3], 1
    %s998 = scalar_lea.sflag [#allocation3], 1
    %999 = vsyncpa %s998, 1

</llo_original>
